<compile_context>
chip_gen: v7x
topology: tpu7x:2x2x1
jax: 0.10.0
libtpu: 0.0.40
codegen_flags: <defaults>
</compile_context>

<pallas_src>
import functools

import numpy as np

import jax
import jax.numpy as jnp
from jax.experimental import pallas as pl
from jax.experimental.pallas import tpu as pltpu

DEFAULT_TIME_WARP_MODE = "bicubic"
_CUBIC_A = -0.75  # PyTorch's bicubic coefficient


# ---------------------------------------------------------------------------
# Host-side: 4-tap bicubic band representation (matches torch bicubic,
# align_corners=False, with border index clamping). Fully vectorized numpy.
# ---------------------------------------------------------------------------
def _cubic_w1(x, a=_CUBIC_A):
    # |x| <= 1
    return ((a + 2.0) * x - (a + 3.0)) * x * x + 1.0


def _cubic_w2(x, a=_CUBIC_A):
    # 1 < |x| < 2
    return ((a * x - 5.0 * a) * x + 8.0 * a) * x - 4.0 * a


def _segment_taps(out_start, out_size, in_start, in_size):
    """4-tap taps of a 1-D bicubic resize segment.

    Returns (idx, w), each (out_size, 4): absolute clamped input rows and
    weights for output rows out_start .. out_start + out_size - 1.
    """
    j = np.arange(out_size, dtype=np.float64)
    scale = in_size / out_size
    src = (j + 0.5) * scale - 0.5
    i0 = np.floor(src).astype(np.int64)
    frac = src - i0
    w = np.stack(
        [_cubic_w2(frac + 1.0), _cubic_w1(frac),
         _cubic_w1(1.0 - frac), _cubic_w2(2.0 - frac)],
        axis=1,
    )
    idx = np.clip(i0[:, None] + np.arange(-1, 3)[None, :], 0, in_size - 1) + in_start
    return idx, w


def _round_up(x, m):
    return ((x + m - 1) // m) * m


def _pick_time_block(t):
    """M/K tile along Time: prefer 256 (v6e/v7x MXU), 128 when it cuts padding."""
    if t >= 256:
        return 256 if _round_up(t, 256) <= _round_up(t, 128) else 128
    if t >= 128:
        return 128
    return _round_up(max(t, 16), 16)


def _pick_tn(n_pad, cap):
    """Largest multiple of 128 that divides n_pad and is <= cap."""
    best = 128
    d = 128
    while d <= min(n_pad, cap):
        if n_pad % d == 0:
            best = d
        d += 128
    return best


def _build_time_warp_taps(t, center, warped):
    """Tap weights/indices for the full (T,T) warp, plus per-M-tile band offsets."""
    idx_l, w_l = _segment_taps(0, warped, 0, center)
    idx_r, w_r = _segment_taps(warped, t - warped, center, t - center)
    tap_idx = np.concatenate([idx_l, idx_r], axis=0).astype(np.int32)   # (t, 4)
    tap_w = np.concatenate([w_l, w_r], axis=0).astype(np.float32)       # (t, 4)

    t_blk = _pick_time_block(t)
    t_pad = _round_up(t, t_blk)
    n_mt = t_pad // t_blk

    tile = np.arange(t) // t_blk
    lo = np.full(n_mt, t, dtype=np.int64)
    hi = np.zeros(n_mt, dtype=np.int64)
    np.minimum.at(lo, tile, tap_idx.min(axis=1))
    np.maximum.at(hi, tile, tap_idx.max(axis=1) + 1)

    kb = lo // t_blk                               # first K block of the band per M tile
    need = -(-(hi - kb * t_blk) // t_blk)          # ceil-div: K blocks needed per tile
    n_kb = int(max(1, need.max()))
    n_kb = min(1 << (n_kb - 1).bit_length(), n_mt)  # pow2 -> bounded set of recompiles
    kb = np.clip(kb, 0, n_mt - n_kb).astype(np.int32)
    return tap_w, tap_idx, kb, t_blk, n_kb


# ---------------------------------------------------------------------------
# Pallas kernels: banded matmul  Y = W_band @ X_window  (X window picked by the
# scalar-prefetched band offsets kb[i]).
# ---------------------------------------------------------------------------
def _band_warp_kernel_single(kb_ref, w_ref, x_ref, o_ref):
    del kb_ref  # used only by the index_maps (scalar-prefetched band offsets)
    o_ref[...] = jnp.dot(
        w_ref[...], x_ref[...], preferred_element_type=jnp.float32
    ).astype(o_ref.dtype)


def _band_warp_kernel_multi(kb_ref, w_ref, x_ref, o_ref, acc_ref):
    del kb_ref

    @pl.when(pl.program_id(2) == 0)
    def _init():
        acc_ref[...] = jnp.zeros_like(acc_ref)

    acc_ref[...] += jnp.dot(w_ref[...], x_ref[...],
                            preferred_element_type=jnp.float32)

    @pl.when(pl.program_id(2) == pl.num_programs(2) - 1)
    def _finalize():
        o_ref[...] = acc_ref[...].astype(o_ref.dtype)


# ---------------------------------------------------------------------------
# Jitted apply: fold batch into N, expand band on device, run the kernel.
# ---------------------------------------------------------------------------
@functools.partial(jax.jit, static_argnames=("t_blk", "n_kb"))
def _time_warp_apply(tap_w, tap_idx, kb, x, *, t_blk, n_kb):
    """out[b, t, f] = sum_k tap_w[t, k] * x[b, tap_idx[t, k], f]."""
    B, T, F = x.shape
    n_mt = kb.shape[0]
    t_pad = n_mt * t_blk
    kwin = n_kb * t_blk
    N = B * F
    n_pad = _round_up(N, 128)

    # Layout plumbing (inside jit): fold batch into the lane (N) dim, cast to
    # bf16 once, pad to tile multiples (zeros -> padded rows/cols contribute 0).
    # TODO(synk): when F % 128 == 0, read x directly as (B, T, F) blocks and
    #             drop the two fold transposes entirely.
    x2 = jnp.transpose(x, (1, 0, 2)).reshape(T, N).astype(jnp.bfloat16)
    x2 = jnp.pad(x2, ((0, t_pad - T), (0, n_pad - N)))

    # Expand (T, 4) taps into the per-tile dense band (T_pad, Kwin) on device.
    rows_tile = jnp.arange(T, dtype=jnp.int32) // t_blk
    col = tap_idx - (kb[rows_tile] * t_blk)[:, None]                 # (T, 4), in [0, kwin)
    onehot = col[:, :, None] == jnp.arange(kwin, dtype=jnp.int32)    # (T, 4, kwin)
    w_band = jnp.sum(jnp.where(onehot, tap_w[:, :, None], 0.0), axis=1)
    w_band = jnp.pad(w_band, ((0, t_pad - T), (0, 0))).astype(jnp.bfloat16)

    # Tiles / grid.
    tn = _pick_tn(n_pad, 1024)
    n_nt = n_pad // tn
    if n_mt == 1 and n_nt == 1 and n_pad >= 256:
        # Keep >= 2 blocks on a parallel axis so both v7x TensorCores get work.
        tn = _pick_tn(n_pad, n_pad // 2)
        n_nt = n_pad // tn

    out_item = jnp.dtype(x.dtype).itemsize
    # Double-buffered W + X + out tiles (+ f32 acc when K is tiled), bf16 operands.
    footprint = (2 * t_blk * t_blk * 2 + 2 * t_blk * tn * 2
                 + 2 * t_blk * tn * out_item
                 + (t_blk * tn * 4 if n_kb > 1 else 0))
    vmem_limit = int(min(56 << 20, max(32 << 20, 2 * footprint + (4 << 20))))

    flops = 2 * t_pad * kwin * n_pad
    bytes_accessed = t_pad * kwin * 2 + t_pad * n_pad * 2 + t_pad * n_pad * out_item
    cost = pl.CostEstimate(flops=flops, transcendentals=0,
                           bytes_accessed=bytes_accessed)

    if n_kb == 1:
        y2 = pl.pallas_call(
            _band_warp_kernel_single,
            out_shape=jax.ShapeDtypeStruct((t_pad, n_pad), x.dtype),
            grid_spec=pltpu.PrefetchScalarGridSpec(
                num_scalar_prefetch=1,
                grid=(n_mt, n_nt),
                in_specs=[
                    pl.BlockSpec((t_blk, kwin), lambda i, j, kb_ref: (i, 0)),
                    pl.BlockSpec((kwin, tn), lambda i, j, kb_ref: (kb_ref[i], j)),
                ],
                out_specs=pl.BlockSpec((t_blk, tn), lambda i, j, kb_ref: (i, j)),
            ),
            compiler_params=pltpu.CompilerParams(
                dimension_semantics=("parallel", "parallel"),
                vmem_limit_bytes=vmem_limit,
            ),
            cost_estimate=cost,
        )(kb, w_band, x2)
    else:
        y2 = pl.pallas_call(
            _band_warp_kernel_multi,
            out_shape=jax.ShapeDtypeStruct((t_pad, n_pad), x.dtype),
            grid_spec=pltpu.PrefetchScalarGridSpec(
                num_scalar_prefetch=1,
                grid=(n_mt, n_nt, n_kb),
                in_specs=[
                    pl.BlockSpec((t_blk, t_blk), lambda i, j, k, kb_ref: (i, k)),
                    pl.BlockSpec((t_blk, tn),
                                 lambda i, j, k, kb_ref: (kb_ref[i] + k, j)),
                ],
                out_specs=pl.BlockSpec((t_blk, tn), lambda i, j, k, kb_ref: (i, j)),
                scratch_shapes=[pltpu.VMEM((t_blk, tn), jnp.float32)],
            ),
            compiler_params=pltpu.CompilerParams(
                dimension_semantics=("parallel", "parallel", "arbitrary"),
                vmem_limit_bytes=vmem_limit,
            ),
            cost_estimate=cost,
        )(kb, w_band, x2)

    y2 = y2[:T, :N].reshape(T, B, F)
    return jnp.transpose(y2, (1, 0, 2))


# ---------------------------------------------------------------------------
# Module equivalent
# ---------------------------------------------------------------------------
class TimeWarp:
    """JAX/Pallas port of the PyTorch TimeWarp module (bicubic mode)."""

    def __init__(self, window: int = 80, mode: str = DEFAULT_TIME_WARP_MODE, seed: int = 0):
        assert mode == "bicubic", "only bicubic mode implemented"
        self.window = window
        self.mode = mode
        # Host-side RNG, advanced every call (fresh warp per forward, like
        # torch.randint), with no device->host sync.
        self._rng = np.random.default_rng(seed)
        self._last_taps = None  # stashed for testing / reference checks

    def __call__(self, x, x_lengths=None):
        # Only the x_lengths=None / all-equal-lengths path is implemented.
        # TODO(synk): per-utterance ragged path (pad_list over variable x_lengths).
        B, T, F = x.shape
        if T - self.window <= self.window:
            return x, x_lengths

        center = int(self._rng.integers(self.window, T - self.window))
        warped = int(self._rng.integers(center - self.window, center + self.window)) + 1

        tap_w, tap_idx, kb, t_blk, n_kb = _build_time_warp_taps(T, center, warped)
        self._last_taps = (tap_w, tap_idx)
        y = _time_warp_apply(
            jnp.asarray(tap_w), jnp.asarray(tap_idx), jnp.asarray(kb), x,
            t_blk=t_blk, n_kb=n_kb,
        )
        return y, x_lengths


if __name__ == "__main__":
    key = jax.random.PRNGKey(0)
    B, T, F = 2, 16, 16
    x = jax.random.normal(key, (B, T, F), dtype=jnp.float32)
    x_lengths = jnp.full((B,), T, dtype=jnp.int32)

    module = TimeWarp(window=3, mode="bicubic", seed=0)
    y, y_lengths = module(x, x_lengths)
    y = jax.block_until_ready(y)

    assert y.shape == (B, T, F)
    assert y.dtype == x.dtype
    assert bool(jnp.all(jnp.isfinite(y)))

    # Numerical cross-check against a dense reference built from the same taps
    # (bf16 MXU operands -> loose tolerance).
    tap_w, tap_idx = module._last_taps
    Wd = np.zeros((T, T), dtype=np.float64)
    np.add.at(Wd, (np.repeat(np.arange(T), 4), tap_idx.reshape(-1)),
              tap_w.astype(np.float64).reshape(-1))
    y_ref = np.einsum("ts,bsf->btf", Wd, np.asarray(x, dtype=np.float64))
    np.testing.assert_allclose(np.asarray(y, dtype=np.float64), y_ref,
                               rtol=5e-2, atol=5e-2)

    print("KERNEL_OK")
</pallas_src>

<mosaic_0001>
module attributes {stable_mosaic.version = 11 : i64} {
  func.func @_band_warp_kernel_single(%arg0: i32, %arg1: i32, %arg2: memref<1xi32, #tpu.memory_space<smem>>, %arg3: memref<16x16xbf16, #tpu.memory_space<vmem>>, %arg4: memref<16x128xbf16, #tpu.memory_space<vmem>>, %arg5: memref<16x128xf32, #tpu.memory_space<vmem>>) attributes {dimension_semantics = [#tpu.dimension_semantics<parallel>, #tpu.dimension_semantics<parallel>], iteration_bounds = array<i64: 1, 1>, scalar_prefetch = 1 : i64, scratch_operands = 0 : i64, tpu.core_type = #tpu.core_type<tc>, window_params = [{transform_indices = @transform_0, window_bounds = array<i64: 16, 16>}, {transform_indices = @transform_1, window_bounds = array<i64: 16, 128>}, {transform_indices = @transform_2, window_bounds = array<i64: 16, 128>}]} {
    %c0 = arith.constant 0 : index
    %c0_0 = arith.constant 0 : index
    %0 = vector.load %arg3[%c0, %c0_0] : memref<16x16xbf16, #tpu.memory_space<vmem>>, vector<16x16xbf16>
    %c0_1 = arith.constant 0 : index
    %c0_2 = arith.constant 0 : index
    %1 = vector.load %arg4[%c0_1, %c0_2] : memref<16x128xbf16, #tpu.memory_space<vmem>>, vector<16x128xbf16>
    %cst = arith.constant dense<0.000000e+00> : vector<16x128xf32>
    %2 = tpu.matmul %0, %1, %cst {dimension_numbers = #tpu.dot_dimension_numbers<[1], [0], [0], [1], [0, 0, 1, 1], [], []>} : vector<16x16xbf16>, vector<16x128xbf16>, vector<16x128xf32> -> vector<16x128xf32>
    %c0_3 = arith.constant 0 : index
    %c0_4 = arith.constant 0 : index
    %3 = vector.load %arg5[%c0_3, %c0_4] : memref<16x128xf32, #tpu.memory_space<vmem>>, vector<16x128xf32>
    tpu.vector_store %arg5[%c0_3, %c0_4], %2 {strides = array<i32>} : memref<16x128xf32, #tpu.memory_space<vmem>>, vector<16x128xf32>,
    return
  }
  func.func @transform_0(%arg0: i32, %arg1: i32, %arg2: memref<1xi32, #tpu.memory_space<smem>>) -> (i32, i32) {
    %c0_i32 = arith.constant 0 : i32
    %c0_i32_0 = arith.constant 0 : i32
    return %arg0, %c0_i32 : i32, i32
  }
  func.func @transform_1(%arg0: i32, %arg1: i32, %arg2: memref<1xi32, #tpu.memory_space<smem>>) -> (i32, i32) {
    %0 = arith.index_cast %arg0 : i32 to index
    %1 = memref.load %arg2[%0] : memref<1xi32, #tpu.memory_space<smem>>
    %c0_i32 = arith.constant 0 : i32
    return %1, %arg1 : i32, i32
  }
  func.func @transform_2(%arg0: i32, %arg1: i32, %arg2: memref<1xi32, #tpu.memory_space<smem>>) -> (i32, i32) {
    %c0_i32 = arith.constant 0 : i32
    return %arg0, %arg1 : i32, i32
  }
}

</mosaic_0001>

<llo_original>
// kernel: _time_warp_apply.1
$region0: #{_time_warp_apply.1}
  #allocation0 [shape = 'u32[]', space=smem, size = 0x4, offset = 0x4, fixed_abs, tag = 'smem constant byte address 0x4 - core index']
  #allocation1 [shape = 'u32[144,128]{1,0:T(1,128)}', space=vmem, size = 0x12000, scoped, tag = 'internal scratch']
  #allocation2 [shape = 's32[1]{0}', space=sflag, size = 0x4, scoped, tag = 'scoped memory for _time_warp_apply.1']
  #allocation3 [shape = 's32[1]{0:T(128)S(6)}', space=smem, size = 0x200, scoped, tag = 'prefetched SMEM operand 0']
  %s0 = inlined_call_operand.<no memory space> [shape: s32[1], index: 0, kind: input, shape index: {}]
  %s1 = inlined_call_operand.vmem [shape: bf16[16,16], index: 1, kind: input, shape index: {}]
  %s2 = inlined_call_operand.vmem [shape: bf16[16,128], index: 2, kind: input, shape index: {}]
  %s3 = inlined_call_operand.vmem [shape: f32[16,128], index: 3, kind: output, shape index: {}]
  %s4 = sld [smem:[#allocation0]]
  $region18: #{_time_warp_apply.1} parent=0
    _
  %s6 = ssub.s32 1, %s4
  %s7 = scalar_select 0, %s6, %s4
  %8 = sst [smem:[#allocation3]] %s0
  // Predicated region
  $region2: #{_time_warp_apply.1} parent=0 // pred_check
    _
  $region3: #{_time_warp_apply.1} parent=0 // pred_check_branch
    %10 = sbr.rel (0) target = $region5
  $region4: #{_time_warp_apply.1} parent=0 // pred_region
    _
  $region5: #{_time_warp_apply.1} parent=0 // pred_fallthru
    _
  // Predicated region
  $region6: #{_time_warp_apply.1} parent=0 // pred_check
    _
  $region7: #{_time_warp_apply.1} parent=0 // pred_check_branch
    %12 = sbr.rel (0) target = $region9
  $region8: #{_time_warp_apply.1} parent=0 // pred_region
    %s13 = sld [smem:[#allocation3]]
    %s14 = smul.u32 2, %s13
    %p15 = scmp.lt.s32.totalorder %s14, 1
    %s16 = scalar_select %p15, %s14, 1
    %s17 = smul.addr %s16, 4
    %s18 = scalar_lea.vmem %s2, %s17
    %s19 = sld [smem:[#allocation3]]
    %s20 = smul.u32 2, %s19
  $region9: #{_time_warp_apply.1} parent=0 // pred_fallthru
    _
  %s21 = sld [smem:[#allocation3]]
  %s22 = smul.u32 2, %s21
  %p23 = scmp.lt.s32.totalorder %s22, 1
  %s24 = scalar_select %p23, %s22, 1
  %s25 = smul.addr %s24, 4
  %s26 = scalar_lea.vmem %s2, %s25
  %s27 = sld [smem:[#allocation3]]
  %s28 = smul.u32 2, %s27
  %p29 = scmp.lt.s32.totalorder %s28, 1
  %s30 = scalar_select %p29, %s28, 1
  %s31 = smul.addr %s30, 4
  %s32 = scalar_lea.vmem %s2, %s31
  %s33 = sld [smem:[#allocation3]]
  %s34 = smul.u32 2, %s33
  %v36 = vld [vmem:[%s1] sm:$0xf]
  %v37 = vld [vmem:[%s1 + $0x4] sm:$0xf]
  %v38 = vld [vmem:[%s32] sm:$0xf]
  %v39 = vld [vmem:[%s32 + $0x4] sm:$0xf]
  %v42 = vunpack.c.l.b16 %v36
  %v43 = vunpack.c.l.b16 %v37
  %v44 = vpack.c.b16 %v43, %v42
  %v47 = vunpack.c.l.b16 %v38
  %v48 = vunpack.c.l.b16 %v39
  %v49 = vpack.c.b16 %v48, %v47
  %vm51 = vcmask 130048
  %v53 = vsel %vm51, %v44, 0
  %55 = vmatprep.subr.bf16.mxu0 0
  %56 = vmatpush1.bf16.msra.mxu0 %v49
  %57 = vmatprep.subr.bf16.mxu0 0
  %58 = vmatpush1.bf16.msra.mxu0 0
  %59 = vmatprep.subr.bf16.mxu0 0
  %60 = vmatpush1.bf16.msra.mxu0 0
  %61 = vmatprep.subr.bf16.mxu0 0
  %62 = vmatpush1.bf16.msra.mxu0 0
  %63 = vmatprep.subr.bf16.mxu0 0
  %64 = vmatpush1.bf16.msra.mxu0 0
  %65 = vmatprep.subr.bf16.mxu0 0
  %66 = vmatpush1.bf16.msra.mxu0 0
  %67 = vmatprep.subr.bf16.mxu0 0
  %68 = vmatpush1.bf16.msra.mxu0 0
  %69 = vmatprep.subr.bf16.mxu0 0
  %70 = vmatpush1.bf16.msra.mxu0 0
  %71 = vmatprep.subr.bf16.mxu0 0
  %72 = vmatpush1.bf16.msra.mxu0 0
  %73 = vmatprep.subr.bf16.mxu0 0
  %74 = vmatpush1.bf16.msra.mxu0 0
  %75 = vmatprep.subr.bf16.mxu0 0
  %76 = vmatpush1.bf16.msra.mxu0 0
  %77 = vmatprep.subr.bf16.mxu0 0
  %78 = vmatpush1.bf16.msra.mxu0 0
  %79 = vmatprep.subr.bf16.mxu0 0
  %80 = vmatpush1.bf16.msra.mxu0 0
  %81 = vmatprep.subr.bf16.mxu0 0
  %82 = vmatpush1.bf16.msra.mxu0 0
  %83 = vmatprep.subr.bf16.mxu0 0
  %84 = vmatpush1.bf16.msra.mxu0 0
  %85 = vmatprep.subr.bf16.mxu0 0
  %86 = vmatpush1.bf16.msra.mxu0 0
  %87 = vmatprep.mubr.bf16.mxu0 0
  %88 = vmatmul.mubr.bf16.gmra.mrb[0].mxu0 %v53
  %v89 = vpop.f32.mrb[0].mxu0
  %v90 = vadd.f32 0.0, %v89
  %v91 = vpop.f32.mrb[0].mxu0
  %v92 = vpop.f32.mrb[0].mxu0
  %v93 = vadd.f32 0.0, %v92
  %v94 = vpop.f32.mrb[0].mxu0
  %95 = vdwg.mxu0
  %96 = vst [vmem:[%s3] sm:$0xff] %v90
  %97 = vst [vmem:[%s3 + $0x8] sm:$0xff] %v93
  // Predicated region
  $region10: #{_time_warp_apply.1} parent=0 // pred_check
    _
  $region11: #{_time_warp_apply.1} parent=0 // pred_check_branch
    %99 = sbr.rel (0) target = $region13
  $region12: #{_time_warp_apply.1} parent=0 // pred_region
    _
  $region13: #{_time_warp_apply.1} parent=0 // pred_fallthru
    _
  // Predicated region
  $region14: #{_time_warp_apply.1} parent=0 // pred_check
    _
  $region15: #{_time_warp_apply.1} parent=0 // pred_check_branch
    %101 = sbr.rel (0) target = $region17
  $region16: #{_time_warp_apply.1} parent=0 // pred_region
    _
  $region17: #{_time_warp_apply.1} parent=0 // pred_fallthru
    _

</llo_original>
